<compile_context>
chip_gen: v5e
topology: v5e:2x2
jax: 0.10.0
libtpu: 0.0.40
codegen_flags: <defaults>
</compile_context>

<pallas_src>
import functools

import jax
import jax.numpy as jnp
from jax.experimental import pallas as pl
from jax.experimental.pallas import tpu as pltpu


def _round_up(n, m):
    return ((n + m - 1) // m) * m


def _transition_kernel(x_ref, w_fc_ref, fc_vec_ref, w_mu_ref, w_sigma_ref,
                       b_head_ref, mu_ref, sigma_ref, *,
                       min_sigma, max_sigma, ln_eps):
    w_dtype = w_fc_ref.dtype

    # ---- h = fc(x): (TILE_B, F) @ (F, W) on the MXU, f32 accumulation ----
    x = x_ref[...].astype(w_dtype)
    h = jnp.dot(x, w_fc_ref[...], preferred_element_type=jnp.float32)
    h = h + fc_vec_ref[0:1, :]                          # bias row (f32)

    # ---- LayerNorm over the hidden dim (f32, elementwise affine) ----
    # Two independent cross-lane reductions (sum, sum-of-squares) instead of
    # the serial mean -> centered -> mean(centered^2) chain, so the XLU
    # reductions can overlap (helps the latency-bound small-batch case).
    inv_w = 1.0 / h.shape[-1]
    s1 = jnp.sum(h, axis=-1, keepdims=True)
    s2 = jnp.sum(h * h, axis=-1, keepdims=True)
    mean = s1 * inv_w
    var = jnp.maximum(s2 * inv_w - mean * mean, 0.0)    # guard tiny negatives
    hn = (h - mean) * jax.lax.rsqrt(var + ln_eps)
    hn = hn * fc_vec_ref[1:2, :] + fc_vec_ref[2:3, :]   # gamma / beta rows

    # ---- ReLU, single cast to the matmul dtype ----
    hr = jnp.maximum(hn, 0.0).astype(w_dtype)

    # ---- heads: mu = fc_mu(hr), sigma = affine(softplus(fc_sigma(hr))) ----
    mu = jnp.dot(hr, w_mu_ref[...], preferred_element_type=jnp.float32)
    mu = mu + b_head_ref[0:1, :]
    zs = jnp.dot(hr, w_sigma_ref[...], preferred_element_type=jnp.float32)
    zs = zs + b_head_ref[1:2, :]
    softplus = jnp.logaddexp(zs, 0.0)                   # stable log(1 + exp(z))
    sigma = min_sigma + (max_sigma - min_sigma) * softplus

    # Two separate outputs -> no post-kernel column-slice HBM pass.
    mu_ref[...] = mu.astype(mu_ref.dtype)
    sigma_ref[...] = sigma.astype(sigma_ref.dtype)


def _choose_tile_b(batch, max_tile_b):
    """Batch tile: as big as allowed (HBM-roofline), no host-side padding, and
    >=2 grid steps whenever the batch is big enough so DMAs overlap compute
    and the batch axis can shard across both v7x TensorCores."""
    max_tile_b = max(8, _round_up(max_tile_b, 8))
    if batch <= 16:
        # Single block whose dims equal the full array dims (always legal on
        # TPU, even when batch is not a multiple of 8); nothing to overlap.
        return batch
    # At least two grid steps; a ragged tail block is clipped by Pallas, so
    # there is no jnp.pad / extra HBM pass around the kernel.
    half = _round_up(pl.cdiv(batch, 2), 8)
    return min(max_tile_b, half)


def probabilistic_transition_forward(x, params, *, min_sigma=1e-4,
                                     max_sigma=10.0, max_tile_b=4096,
                                     out_dtype=jnp.float32):
    """Full forward pass in a single Pallas kernel.

    x:       (B, encoder_feature_dim + action_shape) float32
    params:  dict from init_params (weights pre-transposed to (in, out),
             bias / LayerNorm vectors packed)
    returns: (mu, sigma), each (B, encoder_feature_dim) of dtype out_dtype
    """
    B, F = x.shape
    W = params["w_fc"].shape[1]
    E = params["w_mu"].shape[1]

    tile_b = _choose_tile_b(B, max_tile_b)
    grid = (pl.cdiv(B, tile_b),)

    kernel = functools.partial(
        _transition_kernel,
        min_sigma=float(min_sigma),
        max_sigma=float(max_sigma),
        ln_eps=1e-5,
    )

    mu, sigma = pl.pallas_call(
        kernel,
        out_shape=(jax.ShapeDtypeStruct((B, E), out_dtype),
                   jax.ShapeDtypeStruct((B, E), out_dtype)),
        grid=grid,
        in_specs=[
            pl.BlockSpec((tile_b, F), lambda i: (i, 0)),   # x: batch-tiled
            pl.BlockSpec((F, W), lambda i: (0, 0)),        # w_fc (VMEM resident)
            pl.BlockSpec((3, W), lambda i: (0, 0)),        # b_fc | gamma | beta
            pl.BlockSpec((W, E), lambda i: (0, 0)),        # w_mu
            pl.BlockSpec((W, E), lambda i: (0, 0)),        # w_sigma
            pl.BlockSpec((2, E), lambda i: (0, 0)),        # b_mu | b_sigma
        ],
        out_specs=(pl.BlockSpec((tile_b, E), lambda i: (i, 0)),
                   pl.BlockSpec((tile_b, E), lambda i: (i, 0))),
        compiler_params=pltpu.CompilerParams(
            dimension_semantics=("parallel",)),            # megacore on v7x
    )(x, params["w_fc"], params["fc_vec"], params["w_mu"],
      params["w_sigma"], params["b_head"])
    return mu, sigma


def init_params(key, encoder_feature_dim, action_shape, layer_width,
                weight_dtype=jnp.bfloat16):
    """Synthetic params matching the module's shapes: weights stored (in, out),
    bias / LayerNorm vectors packed, LN/bias math kept in f32."""
    d_in = encoder_feature_dim + action_shape
    ks = jax.random.split(key, 6)
    s1 = 1.0 / (d_in ** 0.5)
    s2 = 1.0 / (layer_width ** 0.5)
    w_fc = jax.random.uniform(ks[0], (d_in, layer_width), jnp.float32, -s1, s1)
    b_fc = jax.random.uniform(ks[1], (layer_width,), jnp.float32, -s1, s1)
    w_mu = jax.random.uniform(ks[2], (layer_width, encoder_feature_dim),
                              jnp.float32, -s2, s2)
    b_mu = jax.random.uniform(ks[3], (encoder_feature_dim,), jnp.float32, -s2, s2)
    w_sg = jax.random.uniform(ks[4], (layer_width, encoder_feature_dim),
                              jnp.float32, -s2, s2)
    b_sg = jax.random.uniform(ks[5], (encoder_feature_dim,), jnp.float32, -s2, s2)
    return {
        "w_fc": w_fc.astype(weight_dtype),
        "fc_vec": jnp.stack([b_fc,
                             jnp.ones((layer_width,), jnp.float32),
                             jnp.zeros((layer_width,), jnp.float32)], axis=0),
        "w_mu": w_mu.astype(weight_dtype),
        "w_sigma": w_sg.astype(weight_dtype),
        "b_head": jnp.stack([b_mu, b_sg], axis=0),
    }


def _reference_forward(x, params, *, min_sigma=1e-4, max_sigma=10.0):
    """Pure-JAX reference mirroring the PyTorch arithmetic (same matmul input
    dtype as the kernel, f32 everywhere else)."""
    wd = params["w_fc"].dtype
    b_fc = params["fc_vec"][0]
    gamma = params["fc_vec"][1]
    beta = params["fc_vec"][2]
    h = jnp.dot(x.astype(wd).astype(jnp.float32),
                params["w_fc"].astype(jnp.float32),
                precision=jax.lax.Precision.HIGHEST) + b_fc
    mean = jnp.mean(h, axis=-1, keepdims=True)
    var = jnp.mean((h - mean) ** 2, axis=-1, keepdims=True)
    h = (h - mean) / jnp.sqrt(var + 1e-5)
    h = h * gamma + beta
    h = jax.nn.relu(h)
    hq = h.astype(wd).astype(jnp.float32)
    mu = jnp.dot(hq, params["w_mu"].astype(jnp.float32),
                 precision=jax.lax.Precision.HIGHEST) + params["b_head"][0]
    zs = jnp.dot(hq, params["w_sigma"].astype(jnp.float32),
                 precision=jax.lax.Precision.HIGHEST) + params["b_head"][1]
    sigma = jax.nn.softplus(zs)
    sigma = min_sigma + (max_sigma - min_sigma) * sigma
    return mu, sigma


if __name__ == "__main__":
    encoder_feature_dim = 32
    action_shape = 4
    layer_width = 64
    d_in = encoder_feature_dim + action_shape

    key = jax.random.PRNGKey(0)
    k_x, k_p, k_x2, k_x3 = jax.random.split(key, 4)

    # --- default path: bf16 weights on the MXU, f32 accumulate / LN math ---
    x = jax.random.normal(k_x, (8, d_in), dtype=jnp.float32)
    params_bf16 = init_params(k_p, encoder_feature_dim, action_shape, layer_width)
    mu, sigma = probabilistic_transition_forward(x, params_bf16)
    jax.block_until_ready((mu, sigma))
    mu_ref, sigma_ref = _reference_forward(x, params_bf16)
    assert mu.shape == (8, encoder_feature_dim)
    assert sigma.shape == (8, encoder_feature_dim)
    assert jnp.allclose(mu, mu_ref, atol=1e-2, rtol=1e-2)
    assert jnp.allclose(sigma, sigma_ref, atol=1e-2, rtol=1e-2)

    # --- full-f32 path: matches the PyTorch module arithmetic closely ---
    params_f32 = init_params(k_p, encoder_feature_dim, action_shape,
                             layer_width, weight_dtype=jnp.float32)
    mu32, sigma32 = probabilistic_transition_forward(x, params_f32)
    jax.block_until_ready((mu32, sigma32))
    mu32_ref, sigma32_ref = _reference_forward(x, params_f32)
    assert jnp.allclose(mu32, mu32_ref, atol=2e-4, rtol=2e-4)
    assert jnp.allclose(sigma32, sigma32_ref, atol=2e-4, rtol=2e-4)

    # --- multi-block grid + ragged batch: no host-side pad, tail block is
    #     clipped by Pallas (grid = cdiv(200, 64) = 4) ---
    xb = jax.random.normal(k_x2, (200, d_in), dtype=jnp.float32)
    mu_b, sigma_b = probabilistic_transition_forward(xb, params_bf16,
                                                     max_tile_b=64)
    jax.block_until_ready((mu_b, sigma_b))
    mu_b_ref, sigma_b_ref = _reference_forward(xb, params_bf16)
    assert mu_b.shape == (200, encoder_feature_dim)
    assert sigma_b.shape == (200, encoder_feature_dim)
    assert jnp.allclose(mu_b, mu_b_ref, atol=1e-2, rtol=1e-2)
    assert jnp.allclose(sigma_b, sigma_b_ref, atol=1e-2, rtol=1e-2)

    # --- odd small batch, single full-extent block (no padding needed) ---
    xo = jax.random.normal(k_x3, (5, d_in), dtype=jnp.float32)
    mu_o, sigma_o = probabilistic_transition_forward(xo, params_bf16)
    jax.block_until_ready((mu_o, sigma_o))
    mu_o_ref, sigma_o_ref = _reference_forward(xo, params_bf16)
    assert jnp.allclose(mu_o, mu_o_ref, atol=1e-2, rtol=1e-2)
    assert jnp.allclose(sigma_o, sigma_o_ref, atol=1e-2, rtol=1e-2)

    # --- bf16 output path: halves the dominant writeback HBM stream ---
    mu_h, sigma_h = probabilistic_transition_forward(xb, params_bf16,
                                                     out_dtype=jnp.bfloat16)
    jax.block_until_ready((mu_h, sigma_h))
    assert mu_h.dtype == jnp.bfloat16 and sigma_h.dtype == jnp.bfloat16
    assert jnp.allclose(mu_h.astype(jnp.float32), mu_b_ref, atol=5e-2, rtol=2e-2)
    assert jnp.allclose(sigma_h.astype(jnp.float32), sigma_b_ref,
                        atol=5e-2, rtol=2e-2)

    print("KERNEL_OK")
</pallas_src>

<mosaic_0001>
module attributes {stable_mosaic.version = 11 : i64} {
  func.func @_transition_kernel(%arg0: i32, %arg1: memref<8x36xf32, #tpu.memory_space<vmem>>, %arg2: memref<36x64xbf16, #tpu.memory_space<vmem>>, %arg3: memref<3x64xf32, #tpu.memory_space<vmem>>, %arg4: memref<64x32xbf16, #tpu.memory_space<vmem>>, %arg5: memref<64x32xbf16, #tpu.memory_space<vmem>>, %arg6: memref<2x32xf32, #tpu.memory_space<vmem>>, %arg7: memref<8x32xf32, #tpu.memory_space<vmem>>, %arg8: memref<8x32xf32, #tpu.memory_space<vmem>>) attributes {dimension_semantics = [#tpu.dimension_semantics<parallel>], iteration_bounds = array<i64: 1>, scalar_prefetch = 0 : i64, scratch_operands = 0 : i64, tpu.core_type = #tpu.core_type<tc>, window_params = [{transform_indices = @transform_0, window_bounds = array<i64: 8, 36>}, {pipeline_mode = #tpu.pipeline_mode<synchronous>, transform_indices = @transform_1, window_bounds = array<i64: 36, 64>}, {pipeline_mode = #tpu.pipeline_mode<synchronous>, transform_indices = @transform_2, window_bounds = array<i64: 3, 64>}, {pipeline_mode = #tpu.pipeline_mode<synchronous>, transform_indices = @transform_3, window_bounds = array<i64: 64, 32>}, {pipeline_mode = #tpu.pipeline_mode<synchronous>, transform_indices = @transform_4, window_bounds = array<i64: 64, 32>}, {pipeline_mode = #tpu.pipeline_mode<synchronous>, transform_indices = @transform_5, window_bounds = array<i64: 2, 32>}, {transform_indices = @transform_6, window_bounds = array<i64: 8, 32>}, {transform_indices = @transform_7, window_bounds = array<i64: 8, 32>}]} {
    %c0 = arith.constant 0 : index
    %c0_0 = arith.constant 0 : index
    %0 = vector.load %arg1[%c0, %c0_0] : memref<8x36xf32, #tpu.memory_space<vmem>>, vector<8x36xf32>
    %1 = arith.truncf %0 : vector<8x36xf32> to vector<8x36xbf16>
    %c0_1 = arith.constant 0 : index
    %c0_2 = arith.constant 0 : index
    %2 = vector.load %arg2[%c0_1, %c0_2] : memref<36x64xbf16, #tpu.memory_space<vmem>>, vector<36x64xbf16>
    %cst = arith.constant dense<0.000000e+00> : vector<8x64xf32>
    %3 = tpu.matmul %1, %2, %cst {dimension_numbers = #tpu.dot_dimension_numbers<[1], [0], [0], [1], [0, 0, 1, 1], [], []>} : vector<8x36xbf16>, vector<36x64xbf16>, vector<8x64xf32> -> vector<8x64xf32>
    %c0_3 = arith.constant 0 : index
    %c0_4 = arith.constant 0 : index
    %4 = vector.load %arg3[%c0_3, %c0_4] : memref<3x64xf32, #tpu.memory_space<vmem>>, vector<1x64xf32>
    %5 = vector.broadcast %4 : vector<1x64xf32> to vector<8x64xf32>
    %6 = arith.addf %3, %5 : vector<8x64xf32>
    %cst_5 = arith.constant dense<0.000000e+00> : vector<8xf32>
    %7 = vector.multi_reduction <add>, %6, %cst_5 [1] : vector<8x64xf32> to vector<8xf32>
    %8 = vector.shape_cast %7 : vector<8xf32> to vector<8x1xf32>
    %9 = arith.mulf %6, %6 : vector<8x64xf32>
    %cst_6 = arith.constant dense<0.000000e+00> : vector<8xf32>
    %10 = vector.multi_reduction <add>, %9, %cst_6 [1] : vector<8x64xf32> to vector<8xf32>
    %11 = vector.shape_cast %10 : vector<8xf32> to vector<8x1xf32>
    %cst_7 = arith.constant 1.562500e-02 : f32
    %12 = vector.broadcast %cst_7 : f32 to vector<8x1xf32>
    %13 = arith.mulf %8, %12 : vector<8x1xf32>
    %cst_8 = arith.constant 1.562500e-02 : f32
    %14 = vector.broadcast %cst_8 : f32 to vector<8x1xf32>
    %15 = arith.mulf %11, %14 : vector<8x1xf32>
    %16 = arith.mulf %13, %13 : vector<8x1xf32>
    %17 = arith.subf %15, %16 : vector<8x1xf32>
    %cst_9 = arith.constant 0.000000e+00 : f32
    %18 = vector.broadcast %cst_9 : f32 to vector<8x1xf32>
    %19 = arith.maximumf %17, %18 : vector<8x1xf32>
    %20 = vector.broadcast %13 : vector<8x1xf32> to vector<8x64xf32>
    %21 = arith.subf %6, %20 : vector<8x64xf32>
    %cst_10 = arith.constant 9.99999974E-6 : f32
    %22 = vector.broadcast %cst_10 : f32 to vector<8x1xf32>
    %23 = arith.addf %19, %22 : vector<8x1xf32>
    %24 = math.rsqrt %23 : vector<8x1xf32>
    %25 = vector.broadcast %24 : vector<8x1xf32> to vector<8x64xf32>
    %26 = arith.mulf %21, %25 : vector<8x64xf32>
    %c1 = arith.constant 1 : index
    %c0_11 = arith.constant 0 : index
    %27 = vector.load %arg3[%c1, %c0_11] : memref<3x64xf32, #tpu.memory_space<vmem>>, vector<1x64xf32>
    %28 = vector.broadcast %27 : vector<1x64xf32> to vector<8x64xf32>
    %29 = arith.mulf %26, %28 : vector<8x64xf32>
    %c2 = arith.constant 2 : index
    %c0_12 = arith.constant 0 : index
    %30 = vector.load %arg3[%c2, %c0_12] : memref<3x64xf32, #tpu.memory_space<vmem>>, vector<1x64xf32>
    %31 = vector.broadcast %30 : vector<1x64xf32> to vector<8x64xf32>
    %32 = arith.addf %29, %31 : vector<8x64xf32>
    %cst_13 = arith.constant 0.000000e+00 : f32
    %33 = vector.broadcast %cst_13 : f32 to vector<8x64xf32>
    %34 = arith.maximumf %32, %33 : vector<8x64xf32>
    %35 = arith.truncf %34 : vector<8x64xf32> to vector<8x64xbf16>
    %c0_14 = arith.constant 0 : index
    %c0_15 = arith.constant 0 : index
    %36 = vector.load %arg4[%c0_14, %c0_15] : memref<64x32xbf16, #tpu.memory_space<vmem>>, vector<64x32xbf16>
    %cst_16 = arith.constant dense<0.000000e+00> : vector<8x32xf32>
    %37 = tpu.matmul %35, %36, %cst_16 {dimension_numbers = #tpu.dot_dimension_numbers<[1], [0], [0], [1], [0, 0, 1, 1], [], []>} : vector<8x64xbf16>, vector<64x32xbf16>, vector<8x32xf32> -> vector<8x32xf32>
    %c0_17 = arith.constant 0 : index
    %c0_18 = arith.constant 0 : index
    %38 = vector.load %arg6[%c0_17, %c0_18] : memref<2x32xf32, #tpu.memory_space<vmem>>, vector<1x32xf32>
    %39 = vector.broadcast %38 : vector<1x32xf32> to vector<8x32xf32>
    %40 = arith.addf %37, %39 : vector<8x32xf32>
    %c0_19 = arith.constant 0 : index
    %c0_20 = arith.constant 0 : index
    %41 = vector.load %arg5[%c0_19, %c0_20] : memref<64x32xbf16, #tpu.memory_space<vmem>>, vector<64x32xbf16>
    %cst_21 = arith.constant dense<0.000000e+00> : vector<8x32xf32>
    %42 = tpu.matmul %35, %41, %cst_21 {dimension_numbers = #tpu.dot_dimension_numbers<[1], [0], [0], [1], [0, 0, 1, 1], [], []>} : vector<8x64xbf16>, vector<64x32xbf16>, vector<8x32xf32> -> vector<8x32xf32>
    %c1_22 = arith.constant 1 : index
    %c0_23 = arith.constant 0 : index
    %43 = vector.load %arg6[%c1_22, %c0_23] : memref<2x32xf32, #tpu.memory_space<vmem>>, vector<1x32xf32>
    %44 = vector.broadcast %43 : vector<1x32xf32> to vector<8x32xf32>
    %45 = arith.addf %42, %44 : vector<8x32xf32>
    %cst_24 = arith.constant 0.000000e+00 : f32
    %46 = vector.broadcast %cst_24 : f32 to vector<8x32xf32>
    %47 = arith.maximumf %45, %46 : vector<8x32xf32>
    %48 = vector.broadcast %cst_24 : f32 to vector<8x32xf32>
    %49 = arith.subf %45, %48 : vector<8x32xf32>
    %50 = arith.cmpf one, %49, %49 : vector<8x32xf32>
    %51 = vector.broadcast %cst_24 : f32 to vector<8x32xf32>
    %52 = arith.addf %45, %51 : vector<8x32xf32>
    %53 = math.absf %49 : vector<8x32xf32>
    %cst_25 = arith.constant 0.000000e+00 : f32
    %54 = vector.broadcast %cst_25 : f32 to vector<8x32xf32>
    %55 = arith.subf %54, %53 : vector<8x32xf32>
    %56 = math.exp %55 : vector<8x32xf32>
    %57 = math.log1p %56 : vector<8x32xf32>
    %58 = arith.addf %47, %57 : vector<8x32xf32>
    %59 = arith.select %50, %52, %58 : vector<8x32xi1>, vector<8x32xf32>
    %cst_26 = arith.constant 9.99989986 : f32
    %60 = vector.broadcast %cst_26 : f32 to vector<8x32xf32>
    %61 = arith.mulf %60, %59 : vector<8x32xf32>
    %cst_27 = arith.constant 9.99999974E-5 : f32
    %62 = vector.broadcast %cst_27 : f32 to vector<8x32xf32>
    %63 = arith.addf %62, %61 : vector<8x32xf32>
    %c0_28 = arith.constant 0 : index
    %c0_29 = arith.constant 0 : index
    %64 = vector.load %arg7[%c0_28, %c0_29] : memref<8x32xf32, #tpu.memory_space<vmem>>, vector<8x32xf32>
    tpu.vector_store %arg7[%c0_28, %c0_29], %40 {strides = array<i32>} : memref<8x32xf32, #tpu.memory_space<vmem>>, vector<8x32xf32>,
    %c0_30 = arith.constant 0 : index
    %c0_31 = arith.constant 0 : index
    %65 = vector.load %arg8[%c0_30, %c0_31] : memref<8x32xf32, #tpu.memory_space<vmem>>, vector<8x32xf32>
    tpu.vector_store %arg8[%c0_30, %c0_31], %63 {strides = array<i32>} : memref<8x32xf32, #tpu.memory_space<vmem>>, vector<8x32xf32>,
    return
  }
  func.func @transform_0(%arg0: i32) -> (i32, i32) {
    %c0_i32 = arith.constant 0 : i32
    %c0_i32_0 = arith.constant 0 : i32
    return %arg0, %c0_i32 : i32, i32
  }
  func.func @transform_1(%arg0: i32) -> (i32, i32) {
    %c0_i32 = arith.constant 0 : i32
    %c0_i32_0 = arith.constant 0 : i32
    %c0_i32_1 = arith.constant 0 : i32
    return %c0_i32, %c0_i32_0 : i32, i32
  }
  func.func @transform_2(%arg0: i32) -> (i32, i32) {
    %c0_i32 = arith.constant 0 : i32
    %c0_i32_0 = arith.constant 0 : i32
    %c0_i32_1 = arith.constant 0 : i32
    return %c0_i32, %c0_i32_0 : i32, i32
  }
  func.func @transform_3(%arg0: i32) -> (i32, i32) {
    %c0_i32 = arith.constant 0 : i32
    %c0_i32_0 = arith.constant 0 : i32
    %c0_i32_1 = arith.constant 0 : i32
    return %c0_i32, %c0_i32_0 : i32, i32
  }
  func.func @transform_4(%arg0: i32) -> (i32, i32) {
    %c0_i32 = arith.constant 0 : i32
    %c0_i32_0 = arith.constant 0 : i32
    %c0_i32_1 = arith.constant 0 : i32
    return %c0_i32, %c0_i32_0 : i32, i32
  }
  func.func @transform_5(%arg0: i32) -> (i32, i32) {
    %c0_i32 = arith.constant 0 : i32
    %c0_i32_0 = arith.constant 0 : i32
    %c0_i32_1 = arith.constant 0 : i32
    return %c0_i32, %c0_i32_0 : i32, i32
  }
  func.func @transform_6(%arg0: i32) -> (i32, i32) {
    %c0_i32 = arith.constant 0 : i32
    %c0_i32_0 = arith.constant 0 : i32
    return %arg0, %c0_i32 : i32, i32
  }
  func.func @transform_7(%arg0: i32) -> (i32, i32) {
    %c0_i32 = arith.constant 0 : i32
    %c0_i32_0 = arith.constant 0 : i32
    return %arg0, %c0_i32 : i32, i32
  }
}

</mosaic_0001>

<llo_original>
// kernel: tpu_custom_call.1
$region0: #{tpu_custom_call.1}
  #allocation0 [shape = 'u32[]', space=smem, size = 0x4, offset = 0x4, fixed_abs, tag = 'smem constant byte address 0x4 - core index']
  #allocation1 [shape = 'u32[72,128]{1,0:T(1,128)}', space=vmem, size = 0x9000, scoped, tag = 'internal scratch']
  %s0 = inlined_call_operand.vmem [shape: f32[8,36], index: 0, kind: input, shape index: {}]
  %s1 = inlined_call_operand.vmem [shape: bf16[36,64], index: 1, kind: input, shape index: {}]
  %s2 = inlined_call_operand.vmem [shape: f32[3,64], index: 2, kind: input, shape index: {}]
  %s3 = inlined_call_operand.vmem [shape: bf16[64,32], index: 3, kind: input, shape index: {}]
  %s4 = inlined_call_operand.vmem [shape: bf16[64,32], index: 4, kind: input, shape index: {}]
  %s5 = inlined_call_operand.vmem [shape: f32[2,32], index: 5, kind: input, shape index: {}]
  %s6 = inlined_call_operand.hbm [shape: f32[8,32], index: 6, kind: output, shape index: {0}]
  %s7 = inlined_call_operand.hbm [shape: f32[8,32], index: 7, kind: output, shape index: {1}]
  %8 = xla_tuple %s6, %s7
  %s9 = sld [smem:[#allocation0]]
  $region42: #{tpu_custom_call.1} parent=0
    _
  %s11 = ssub.s32 1, %s9
  %s12 = scalar_select 0, %s11, %s9
  $region1: #{tpu_custom_call.1} parent=0
    #allocation2 [shape = 'u8[4096]{0}', space=vmem, size = 0x1000, scoped, tag = 'output window, operand 0, single buffered']
    #allocation3 [shape = 's32[1]{0}', space=sflag, size = 0x4, scoped, tag = 'scoped memory for tpu_custom_call.1']
    #allocation4 [shape = 'u8[4096]{0}', space=vmem, size = 0x1000, scoped, tag = 'output window, operand 1, single buffered']
    #allocation5 [shape = 's32[1]{0}', space=sflag, size = 0x4, scoped, tag = 'scoped memory for tpu_custom_call.1']
    %13 = vsyncpa [#allocation3], 0
    %14 = vsyncpa [#allocation5], 0
    // Predicated region
    $region2: #{tpu_custom_call.1} parent=1 // pred_check
      _
    $region3: #{tpu_custom_call.1} parent=1 // pred_check_branch
      %16 = sbr.rel (0) target = $region5
    $region4: #{tpu_custom_call.1} parent=1 // pred_region
      _
    $region5: #{tpu_custom_call.1} parent=1 // pred_fallthru
      _
    // Predicated region
    $region6: #{tpu_custom_call.1} parent=1 // pred_check
      _
    $region7: #{tpu_custom_call.1} parent=1 // pred_check_branch
      %18 = sbr.rel (0) target = $region9
    $region8: #{tpu_custom_call.1} parent=1 // pred_region
      _
    $region9: #{tpu_custom_call.1} parent=1 // pred_fallthru
      _
    // Predicated region
    $region10: #{tpu_custom_call.1} parent=1 // pred_check
      _
    $region11: #{tpu_custom_call.1} parent=1 // pred_check_branch
      %20 = sbr.rel (0) target = $region13
    $region12: #{tpu_custom_call.1} parent=1 // pred_region
      _
    $region13: #{tpu_custom_call.1} parent=1 // pred_fallthru
      _
    // Predicated region
    $region14: #{tpu_custom_call.1} parent=1 // pred_check
      _
    $region15: #{tpu_custom_call.1} parent=1 // pred_check_branch
      %22 = sbr.rel (0) target = $region17
    $region16: #{tpu_custom_call.1} parent=1 // pred_region
      _
    $region17: #{tpu_custom_call.1} parent=1 // pred_fallthru
      _
    // Predicated region
    $region18: #{tpu_custom_call.1} parent=1 // pred_check
      _
    $region19: #{tpu_custom_call.1} parent=1 // pred_check_branch
      %24 = sbr.rel (0) target = $region21
    $region20: #{tpu_custom_call.1} parent=1 // pred_region
      _
    $region21: #{tpu_custom_call.1} parent=1 // pred_fallthru
      _
    // Predicated region
    $region22: #{tpu_custom_call.1} parent=1 // pred_check
      _
    $region23: #{tpu_custom_call.1} parent=1 // pred_check_branch
      %26 = sbr.rel (0) target = $region25
    $region24: #{tpu_custom_call.1} parent=1 // pred_region
      _
    $region25: #{tpu_custom_call.1} parent=1 // pred_fallthru
      _
    %v28 = vld [vmem:[%s0] sm:$0xff]
    %v29 = vpack.c.bf16 %v28, %v28
    %v30 = vld [vmem:[%s1] sm:$0xf]
    %v31 = vld [vmem:[%s1 + $0x4] sm:$0xf]
    %v32 = vld [vmem:[%s1 + $0x8] sm:$0xf]
    %v33 = vld [vmem:[%s1 + $0xc] sm:$0xf]
    %v34 = vld [vmem:[%s1 + $0x10] sm:$0x3]
    %v35 = vld [vmem:[%s2] sm:$0x1]
    %v36 = vperm.slane %v35, 0
    %v42 = vunpack.c.l.b16 %v30
    %v43 = vunpack.c.l.b16 %v31
    %v44 = vunpack.c.l.b16 %v32
    %v45 = vunpack.c.l.b16 %v33
    %v46 = vunpack.c.l.b16 %v34
    %v47 = vpack.c.b16 %v43, %v42
    %v48 = vpack.c.b16 %v45, %v44
    %v49 = vpack.c.b16 %v46, %v46
    %vm52 = vcmask 293888
    %v54 = vsel %vm52, %v29, 0
    %vm56 = vcmask 1041408
    %v58 = vsel %vm56, %v49, 0
    %60 = vmatpush.bf16.msra.mxu0 0
    %61 = vmatpush.bf16.msra.mxu0 0
    %62 = vmatpush.bf16.msra.mxu0 0
    %63 = vmatpush.bf16.msra.mxu0 0
    %64 = vmatpush.bf16.msra.mxu0 0
    %65 = vmatpush.bf16.msra.mxu0 %v58
    %66 = vmatpush.bf16.msra.mxu0 %v48
    %67 = vmatpush.bf16.msra.mxu0 %v47
    %68 = vmatmul.bf16.gmra.mxu0 %v54
    %v69 = vpop.f32.mrf.mxu0
    %v70 = vadd.f32 %v36, %v69
    %v71 = vpop.f32.mrf.mxu0
    %72 = vdwg.mxu0
    %vm73 = vcmask 523264
    %v74 = vsel %vm73, %v70, 0.0
    %75 = vadd.xlane.f32.xlu0 %v74
    %v76 = vpop.xlane.xlu0 %75
    %v77 = vmul.f32 %v70, %v70
    %v78 = vsel %vm73, %v77, 0.0
    %79 = vadd.xlane.f32.xlu0 %v78
    %v80 = vpop.xlane.xlu0 %79
    %v81 = vmul.f32 %v76, 0.015625
    %v82 = vmul.f32 %v80, 0.015625
    %v83 = vmul.f32 %v81, %v81
    %v84 = vsub.f32 %v82, %v83
    %v85 = vmax.f32 %v84, 0.0
    %v86 = vsub.f32 %v70, %v81
    %v87 = vadd.f32 %v85, 1e-05
    %v88 = vrsqrt.pop %v87
    %v89 = vmul.f32 %v88, %v87
    %v90 = vmul.f32 %v89, %v88
    %v91 = vmul.f32 0.5, %v90
    %v92 = vsub.f32 1.5, %v91
    %v93 = vmul.f32 %v88, %v92
    %vm94 = vweird.f32 %v87
    %vm95 = vweird.f32 %v88
    %vm96 = vmor %vm94, %vm95
    %v97 = vsel %vm96, %v88, %v93
    %v98 = vmul.f32 %v86, %v97
    %v99 = vld [vmem:[%s2 + $0x1] sm:$0x1]
    %v100 = vperm.slane %v99, 0
    %v101 = vmul.f32 %v98, %v100
    %v102 = vld [vmem:[%s2 + $0x2] sm:$0x1]
    %v103 = vperm.slane %v102, 0
    %v104 = vadd.f32 %v101, %v103
    %v105 = vmax.f32 %v104, 0.0
    %v106 = vpack.c.bf16 %v105, %v105
    %v107 = vld [vmem:[%s3] sm:$0xf]
    %v108 = vld [vmem:[%s3 + $0x4] sm:$0xf]
    %v109 = vld [vmem:[%s3 + $0x8] sm:$0xf]
    %v110 = vld [vmem:[%s3 + $0xc] sm:$0xf]
    %v111 = vld [vmem:[%s3 + $0x10] sm:$0xf]
    %v112 = vld [vmem:[%s3 + $0x14] sm:$0xf]
    %v113 = vld [vmem:[%s3 + $0x18] sm:$0xf]
    %v114 = vld [vmem:[%s3 + $0x1c] sm:$0xf]
    %v115 = vld [vmem:[%s5] sm:$0x1]
    %v116 = vperm.slane %v115, 0
    %v125 = vunpack.c.l.b16 %v107
    %v126 = vunpack.c.l.b16 %v108
    %v127 = vunpack.c.l.b16 %v109
    %v128 = vunpack.c.l.b16 %v110
    %v129 = vunpack.c.l.b16 %v111
    %v130 = vunpack.c.l.b16 %v112
    %v131 = vunpack.c.l.b16 %v113
    %v132 = vunpack.c.l.b16 %v114
    %v133 = vpack.c.b16 %v126, %v125
    %v134 = vpack.c.b16 %v128, %v127
    %v135 = vpack.c.b16 %v130, %v129
    %v136 = vpack.c.b16 %v132, %v131
    %v142 = vsel %vm73, %v106, 0
    %144 = vmatpush.bf16.msra.mxu0 0
    %145 = vmatpush.bf16.msra.mxu0 0
    %146 = vmatpush.bf16.msra.mxu0 0
    %147 = vmatpush.bf16.msra.mxu0 0
    %148 = vmatpush.bf16.msra.mxu0 %v136
    %149 = vmatpush.bf16.msra.mxu0 %v135
    %150 = vmatpush.bf16.msra.mxu0 %v134
    %151 = vmatpush.bf16.msra.mxu0 %v133
    %152 = vmatmul.bf16.gmra.mxu0 %v142
    %v153 = vpop.f32.mrf.mxu0
    %v154 = vadd.f32 %v116, %v153
    %v155 = vpop.f32.mrf.mxu0
    %156 = vdwg.mxu0
    %v157 = vld [vmem:[%s4] sm:$0xf]
    %v158 = vld [vmem:[%s4 + $0x4] sm:$0xf]
    %v159 = vld [vmem:[%s4 + $0x8] sm:$0xf]
    %v160 = vld [vmem:[%s4 + $0xc] sm:$0xf]
    %v161 = vld [vmem:[%s4 + $0x10] sm:$0xf]
    %v162 = vld [vmem:[%s4 + $0x14] sm:$0xf]
    %v163 = vld [vmem:[%s4 + $0x18] sm:$0xf]
    %v164 = vld [vmem:[%s4 + $0x1c] sm:$0xf]
    %v165 = vld [vmem:[%s5 + $0x1] sm:$0x1]
    %v166 = vperm.slane %v165, 0
    %v175 = vunpack.c.l.b16 %v157
    %v176 = vunpack.c.l.b16 %v158
    %v177 = vunpack.c.l.b16 %v159
    %v178 = vunpack.c.l.b16 %v160
    %v179 = vunpack.c.l.b16 %v161
    %v180 = vunpack.c.l.b16 %v162
    %v181 = vunpack.c.l.b16 %v163
    %v182 = vunpack.c.l.b16 %v164
    %v183 = vpack.c.b16 %v176, %v175
    %v184 = vpack.c.b16 %v178, %v177
    %v185 = vpack.c.b16 %v180, %v179
    %v186 = vpack.c.b16 %v182, %v181
    %191 = vmatpush.bf16.msra.mxu0 0
    %192 = vmatpush.bf16.msra.mxu0 0
    %193 = vmatpush.bf16.msra.mxu0 0
    %194 = vmatpush.bf16.msra.mxu0 0
    %195 = vmatpush.bf16.msra.mxu0 %v186
    %196 = vmatpush.bf16.msra.mxu0 %v185
    %197 = vmatpush.bf16.msra.mxu0 %v184
    %198 = vmatpush.bf16.msra.mxu0 %v183
    %199 = vmatmul.bf16.gmra.mxu0 %v142
    %v200 = vpop.f32.mrf.mxu0
    %v201 = vadd.f32 %v166, %v200
    %v202 = vpop.f32.mrf.mxu0
    %203 = vdwg.mxu0
    %v204 = vmax.f32 %v201, 0.0
    %vm205 = vcmp.ne.f32.partialorder %v201, %v201
    %v206 = vadd.f32 %v201, 0.0
    %v207 = vand.u32 2147483647, %v201
    %v208 = vsub.f32 0.0, %v207
    %v209 = vmul.f32 %v208, 1.442695
    %v210 = vpow.pop %v209
    %v211 = vadd.f32 %v210, 1.0
    %v212 = vlog2.pop %v211
    %v213 = vmul.f32 %v212, 0.6931472
    %v214 = vmul.f32 -0.5, %v210
    %v215 = vadd.f32 %v214, 1.0
    %v216 = vmul.f32 %v215, %v210
    %v217 = vand.u32 2147483647, %v210
    %vm218 = vcmp.lt.f32.partialorder %v217, 0.0004427343
    %v219 = vsel %vm218, %v216, %v213
    %v220 = vadd.f32 %v204, %v219
    %v221 = vsel %vm205, %v206, %v220
    %v222 = vmul.f32 %v221, 9.9999
    %v223 = vadd.f32 %v222, 0.0001
    %vm224 = vcmask 261120
    %225 = vst.msk [vmem:[#allocation2] sm:$0xff] %vm224, %v154
    %226 = vst.msk [vmem:[#allocation4] sm:$0xff] %vm224, %v223
    // Predicated region
    $region26: #{tpu_custom_call.1} parent=1 // pred_check
      _
    $region27: #{tpu_custom_call.1} parent=1 // pred_check_branch
      %228 = sbr.rel (0) target = $region29
    $region28: #{tpu_custom_call.1} parent=1 // pred_region
      %230 = vsyncadd [#allocation3], 0
      %s232 = sshll.u32 [#allocation2], 4
      %s233 = int_to_ptr.vmem [resolvable:$true] %s232
      %s234 = sshll.u32 %s6, 4
      %s235 = int_to_ptr.hbm [resolvable:$true] %s234
      %237 = dma.vmem_to_hbm [thread:$0]  %s233, 128, %s235, [#allocation3]
    $region29: #{tpu_custom_call.1} parent=1 // pred_fallthru
      _
    // Predicated region
    $region30: #{tpu_custom_call.1} parent=1 // pred_check
      _
    $region31: #{tpu_custom_call.1} parent=1 // pred_check_branch
      %239 = sbr.rel (0) target = $region33
    $region32: #{tpu_custom_call.1} parent=1 // pred_region
      %241 = vsyncadd [#allocation5], 0
      %s243 = sshll.u32 [#allocation4], 4
      %s244 = int_to_ptr.vmem [resolvable:$true] %s243
      %s245 = sshll.u32 %s7, 4
      %s246 = int_to_ptr.hbm [resolvable:$true] %s245
      %248 = dma.vmem_to_hbm [thread:$0]  %s244, 128, %s246, [#allocation5]
    $region33: #{tpu_custom_call.1} parent=1 // pred_fallthru
      _
    // Predicated region
    $region34: #{tpu_custom_call.1} parent=1 // pred_check
      _
    $region35: #{tpu_custom_call.1} parent=1 // pred_check_branch
      %250 = sbr.rel (0) target = $region37
    $region36: #{tpu_custom_call.1} parent=1 // pred_region
      %252 = dma.done [#allocation3], 128
    $region37: #{tpu_custom_call.1} parent=1 // pred_fallthru
      _
    // Predicated region
    $region38: #{tpu_custom_call.1} parent=1 // pred_check
      _
    $region39: #{tpu_custom_call.1} parent=1 // pred_check_branch
      %254 = sbr.rel (0) target = $region41
    $region40: #{tpu_custom_call.1} parent=1 // pred_region
      %256 = dma.done [#allocation5], 128
    $region41: #{tpu_custom_call.1} parent=1 // pred_fallthru
      _
    %257 = vsyncpa [#allocation3], 1
    %258 = vsyncpa [#allocation5], 1

</llo_original>
